<compile_context>
chip_gen: v7x
topology: tpu7x:2x2x1
jax: 0.10.0
libtpu: 0.0.40
codegen_flags: <defaults>
</compile_context>

<pallas_src>
import math

import jax
import jax.numpy as jnp
from jax.experimental import pallas as pl
from jax.experimental.pallas import tpu as pltpu


_VMEM_BUDGET = 26 * 1024 * 1024       # per-kernel working-set target
_VMEM_LIMIT_BYTES = 32 * 1024 * 1024  # explicit scoped-VMEM limit (ok on v5e/v6e/v7x)


def _round_up(x, m):
    return (x + m - 1) // m * m


# ----------------------------------------------------------------------------
# Tile planning
# ----------------------------------------------------------------------------
def _plan_tiles(n, d_pad, cap=_VMEM_BUDGET):
    """Pick (tm, tk, n_pad) for the aggregation kernel.

    tk is None when an A row-block (tm, n_pad) plus the full xW fit the VMEM
    budget -> xW stays resident and there is no reduction grid axis.
    Otherwise the kernel streams (tm, tk) A tiles and (tk, d_pad) xW slices,
    accumulating into the resident output block.
    """
    n8 = _round_up(n, 8)
    n_pad = _round_up(n8, 16) if n8 <= 1024 else _round_up(n8, 128)

    # Row tile: largest multiple of 8 dividing n_pad, <= 512, preferring
    # >= 2 row tiles so v7x's two TensorCores both get work.
    tm_cands = [t for t in range(8, min(512, n_pad) + 1, 8) if n_pad % t == 0]
    two_tile = [t for t in tm_cands if n_pad // t >= 2]
    tm = max(two_tile) if two_tile else max(tm_cands)

    def vbytes(t_m, t_k, xw_rows):
        return (2 * t_m * t_k * 2          # A tiles (bf16, double-buffered)
                + 2 * xw_rows * d_pad * 2  # xW (bf16)
                + 2 * d_pad * 4            # bias
                + 2 * t_m * d_pad * 4)     # f32 output block (accumulator)

    # Case 1: resident xW, full-K row-block dot.
    if vbytes(tm, n_pad, n_pad) <= cap:
        return tm, None, n_pad

    # Case 2: k-tiled streaming.  Shrink tm first if even tk=128 blows the
    # budget (very wide d_pad), then take the largest lane-aligned tk.
    while tm > 8 and vbytes(tm, 128, 128) > cap:
        smaller = [t for t in tm_cands if t < tm]
        if not smaller:
            break
        tm = max(smaller)
    tk_cands = [t for t in range(128, n_pad + 1, 128)
                if n_pad % t == 0 and vbytes(tm, t, t) <= cap]
    preferred = [t for t in tk_cands if t <= 4096]
    if preferred:
        tk = max(preferred)
    elif tk_cands:
        tk = max(tk_cands)
    else:
        # Pathological (tiny n, huge d): single k step; vmem_limit headroom.
        tk = n_pad
    return tm, tk, n_pad


def _choose_kd_tile(tm, d_pad, cap=_VMEM_BUDGET):
    """K-tile for the feature transform (x @ W)."""
    def fbytes(tkd):
        return (2 * tm * tkd * 2 + 2 * tkd * d_pad * 2
                + 2 * tm * d_pad * 2 + tm * d_pad * 4)
    cands = [t for t in range(128, d_pad + 1, 128)
             if d_pad % t == 0 and t <= 1024 and fbytes(t) <= cap]
    return max(cands) if cands else 128


# ----------------------------------------------------------------------------
# Kernel 1: feature transform  xW = x @ W  (bf16 operands, f32 accumulate)
# ----------------------------------------------------------------------------
def _xw_kernel(x_ref, w_ref, o_ref, acc_ref):
    kd = pl.program_id(1)

    @pl.when(kd == 0)
    def _():
        acc_ref[...] = jnp.zeros_like(acc_ref)

    acc_ref[...] += jnp.dot(x_ref[...], w_ref[...],
                            preferred_element_type=jnp.float32)

    @pl.when(kd == pl.num_programs(1) - 1)
    def _():
        o_ref[...] = acc_ref[...].astype(o_ref.dtype)


def _feature_transform(x_pad, w_pad, *, tm):
    n_pad, d_pad = x_pad.shape
    tkd = _choose_kd_tile(tm, d_pad)
    return pl.pallas_call(
        _xw_kernel,
        out_shape=jax.ShapeDtypeStruct((n_pad, d_pad), jnp.bfloat16),
        grid_spec=pltpu.PrefetchScalarGridSpec(
            num_scalar_prefetch=0,
            grid=(n_pad // tm, d_pad // tkd),
            in_specs=[
                pl.BlockSpec((tm, tkd), lambda i, k: (i, k)),     # x tile
                pl.BlockSpec((tkd, d_pad), lambda i, k: (k, 0)),  # W k-slice
            ],
            out_specs=pl.BlockSpec((tm, d_pad), lambda i, k: (i, 0)),
            scratch_shapes=[pltpu.VMEM((tm, d_pad), jnp.float32)],
        ),
        compiler_params=pltpu.CompilerParams(
            dimension_semantics=("parallel", "arbitrary"),
            vmem_limit_bytes=_VMEM_LIMIT_BYTES,
        ),
    )(x_pad, w_pad)


# ----------------------------------------------------------------------------
# Kernel 2: aggregation  out = relu(A_hat @ xW + b)
# ----------------------------------------------------------------------------
def _agg_resident_kernel(a_ref, xw_ref, b_ref, o_ref):
    # xW resident in VMEM (constant index map -> single DMA); one full-K dot
    # per row tile with bias + ReLU fused, lane-dense unmasked store.
    o_ref[...] = jnp.maximum(
        jnp.dot(a_ref[...], xw_ref[...], preferred_element_type=jnp.float32)
        + b_ref[...],
        0.0,
    )


def _agg_streaming_kernel(a_ref, xw_ref, b_ref, o_ref):
    k = pl.program_id(1)

    @pl.when(k == 0)
    def _():
        o_ref[...] = jnp.zeros_like(o_ref)

    # Accumulate directly into the output block (resident across the k axis).
    o_ref[...] += jnp.dot(a_ref[...], xw_ref[...],
                          preferred_element_type=jnp.float32)

    @pl.when(k == pl.num_programs(1) - 1)
    def _():
        o_ref[...] = jnp.maximum(o_ref[...] + b_ref[...], 0.0)


def _gcn_aggregate(a_pad, xw_pad, b_pad, *, tm, tk):
    n_pad, d_pad = xw_pad.shape
    if tk is None:
        grid = (n_pad // tm,)
        in_specs = [
            pl.BlockSpec((tm, n_pad), lambda i: (i, 0)),     # A row-block
            pl.BlockSpec((n_pad, d_pad), lambda i: (0, 0)),  # xW (resident)
            pl.BlockSpec((1, d_pad), lambda i: (0, 0)),      # bias
        ]
        out_specs = pl.BlockSpec((tm, d_pad), lambda i: (i, 0))
        kernel = _agg_resident_kernel
        dims = ("parallel",)
    else:
        grid = (n_pad // tm, n_pad // tk)
        in_specs = [
            pl.BlockSpec((tm, tk), lambda i, k: (i, k)),      # A tile
            pl.BlockSpec((tk, d_pad), lambda i, k: (k, 0)),   # xW k-slice
            pl.BlockSpec((1, d_pad), lambda i, k: (0, 0)),    # bias
        ]
        out_specs = pl.BlockSpec((tm, d_pad), lambda i, k: (i, 0))
        kernel = _agg_streaming_kernel
        dims = ("parallel", "arbitrary")

    return pl.pallas_call(
        kernel,
        out_shape=jax.ShapeDtypeStruct((n_pad, d_pad), jnp.float32),
        grid_spec=pltpu.PrefetchScalarGridSpec(
            num_scalar_prefetch=0,
            grid=grid,
            in_specs=in_specs,
            out_specs=out_specs,
        ),
        compiler_params=pltpu.CompilerParams(
            dimension_semantics=dims,
            vmem_limit_bytes=_VMEM_LIMIT_BYTES,
        ),
    )(a_pad, xw_pad, b_pad)


# ----------------------------------------------------------------------------
# Adjacency construction (plain JAX) and the full forward
# ----------------------------------------------------------------------------
def _build_normalized_adjacency_padded(edge_index, num_nodes, n_pad,
                                       edge_weight=None, dtype=jnp.bfloat16):
    """Dense D^{-1/2}(A + I)D^{-1/2} (PyG gcn_norm), built at the padded size.

    Padded rows/cols are exactly zero (no self loops there); degrees / rsqrt
    stay in f32, only the final matrix is cast to `dtype`.
    """
    src, dst = edge_index[0], edge_index[1]
    if edge_weight is None:
        edge_weight = jnp.ones(src.shape[0], dtype=jnp.float32)
    a = jnp.zeros((n_pad, n_pad), dtype=jnp.float32)
    a = a.at[dst, src].add(edge_weight.astype(jnp.float32))  # A[t, s] = w(s->t)
    diag = jnp.arange(num_nodes, dtype=jnp.int32)
    a = a.at[diag, diag].add(1.0)                             # self loops
    deg = jnp.sum(a, axis=1)
    dinv = jnp.where(deg > 0.0, jax.lax.rsqrt(deg), 0.0)
    a_hat = dinv[:, None] * a * dinv[None, :]
    # TODO(synk): for genuinely sparse large graphs, avoid this dense O(N^2)
    # materialization — pass A + dinv and apply the scaling inside the
    # aggregation kernel, or use a blocked-CSR layout with scalar prefetch.
    return a_hat.astype(dtype)


def build_normalized_adjacency(edge_index, num_nodes, edge_weight=None):
    """f32, unpadded — pure-JAX reference helper."""
    return _build_normalized_adjacency_padded(
        edge_index, num_nodes, num_nodes, edge_weight, dtype=jnp.float32)


@jax.jit
def _gcn_forward(x, edge_index, edge_weight, w, b):
    n, d = x.shape
    d_pad = _round_up(d, 128)
    tm, tk, n_pad = _plan_tiles(n, d_pad)

    a_pad = _build_normalized_adjacency_padded(edge_index, n, n_pad, edge_weight)

    x_pad = jnp.pad(x.astype(jnp.bfloat16), ((0, n_pad - n), (0, d_pad - d)))
    w_pad = jnp.pad(w.astype(jnp.bfloat16), ((0, d_pad - d), (0, d_pad - d)))
    b_pad = jnp.pad(b.astype(jnp.float32), (0, d_pad - d)).reshape(1, d_pad)

    xw_pad = _feature_transform(x_pad, w_pad, tm=tm)          # bf16 [n_pad, d_pad]
    out_pad = _gcn_aggregate(a_pad, xw_pad, b_pad, tm=tm, tk=tk)
    return out_pad[:n, :d]


class GraphConvLayer:
    """JAX/Pallas equivalent of the PyTorch GraphConvLayer (GCNConv dim->dim)."""

    def __init__(self, dim, layer_num, key):
        assert layer_num >= 1
        self.dim = dim
        self.layer_num = layer_num
        kw, _ = jax.random.split(key)
        limit = math.sqrt(6.0 / (dim + dim))  # Glorot uniform (PyG Linear default)
        self.w = jax.random.uniform(
            kw, (dim, dim), minval=-limit, maxval=limit, dtype=jnp.float32
        )
        self.b = jnp.zeros((dim,), dtype=jnp.float32)

    def __call__(self, x, edge_index, edge_weight=None):
        # The reference loop re-applies GCNConv to the ORIGINAL x each
        # iteration and keeps only the last `m`; every iteration is identical,
        # so a single application is exact and layer_num x cheaper.
        return _gcn_forward(x, edge_index, edge_weight, self.w, self.b)


if __name__ == "__main__":
    key = jax.random.PRNGKey(0)
    k_x, k_w = jax.random.split(key)

    num_nodes = 16
    dim = 32
    layer_num = 3

    x = jax.random.normal(k_x, (num_nodes, dim), dtype=jnp.float32)

    # small deterministic ring + a few extra edges (both directions)
    src = jnp.array([i for i in range(num_nodes)] + [0, 3, 5, 7], dtype=jnp.int32)
    dst = jnp.array(
        [(i + 1) % num_nodes for i in range(num_nodes)] + [8, 12, 1, 14],
        dtype=jnp.int32,
    )
    edge_index = jnp.stack(
        [jnp.concatenate([src, dst]), jnp.concatenate([dst, src])], axis=0
    )

    layer = GraphConvLayer(dim, layer_num, k_w)
    out = layer(x, edge_index)
    out = jax.block_until_ready(out)

    # sanity: shape + finite + nonnegative (post-ReLU)
    assert out.shape == (num_nodes, dim)
    assert bool(jnp.all(jnp.isfinite(out)))
    assert bool(jnp.all(out >= 0.0))

    # correctness vs. pure-JAX f32 reference (bf16 end-to-end tolerance)
    a_hat = build_normalized_adjacency(edge_index, num_nodes)
    ref = jnp.maximum(a_hat @ (x @ layer.w) + layer.b[None, :], 0.0)
    assert bool(jnp.allclose(out, ref, rtol=5e-2, atol=5e-2))

    print("KERNEL_OK")
</pallas_src>

<mosaic_0001>
module attributes {stable_mosaic.version = 11 : i64} {
  func.func private @main(%arg0: i32) attributes {dimension_semantics = [#tpu.dimension_semantics<core_parallel>], iteration_bounds = array<i64: 2>, tpu.core_type = #tpu.core_type<sc_scalar_subcore>, window_params = []} {
    return
  }
}

module attributes {stable_mosaic.version = 11 : i64} {
  func.func private @main(%arg0: i32) attributes {dimension_semantics = [#tpu.dimension_semantics<core_parallel>], iteration_bounds = array<i64: 2>, tpu.core_type = #tpu.core_type<sc_scalar_subcore>, window_params = []} {
    return
  }
}

module attributes {stable_mosaic.version = 11 : i64} {
  func.func @_agg_resident_kernel(%arg0: i32, %arg1: memref<8x16xbf16, #tpu.memory_space<vmem>>, %arg2: memref<16x128xbf16, #tpu.memory_space<vmem>>, %arg3: memref<1x128xf32, #tpu.memory_space<vmem>>, %arg4: memref<8x128xf32, #tpu.memory_space<vmem>>) attributes {dimension_semantics = [#tpu.dimension_semantics<parallel>], iteration_bounds = array<i64: 2>, scalar_prefetch = 0 : i64, scratch_operands = 0 : i64, tpu.core_type = #tpu.core_type<tc>, window_params = [{transform_indices = @transform_0, window_bounds = array<i64: 8, 16>}, {pipeline_mode = #tpu.pipeline_mode<synchronous>, transform_indices = @transform_1, window_bounds = array<i64: 16, 128>}, {pipeline_mode = #tpu.pipeline_mode<synchronous>, transform_indices = @transform_2, window_bounds = array<i64: 1, 128>}, {transform_indices = @transform_3, window_bounds = array<i64: 8, 128>}]} {
    %c0 = arith.constant 0 : index
    %c0_0 = arith.constant 0 : index
    %0 = vector.load %arg1[%c0, %c0_0] : memref<8x16xbf16, #tpu.memory_space<vmem>>, vector<8x16xbf16>
    %c0_1 = arith.constant 0 : index
    %c0_2 = arith.constant 0 : index
    %1 = vector.load %arg2[%c0_1, %c0_2] : memref<16x128xbf16, #tpu.memory_space<vmem>>, vector<16x128xbf16>
    %cst = arith.constant dense<0.000000e+00> : vector<8x128xf32>
    %2 = tpu.matmul %0, %1, %cst {dimension_numbers = #tpu.dot_dimension_numbers<[1], [0], [0], [1], [0, 0, 1, 1], [], []>} : vector<8x16xbf16>, vector<16x128xbf16>, vector<8x128xf32> -> vector<8x128xf32>
    %c0_3 = arith.constant 0 : index
    %c0_4 = arith.constant 0 : index
    %3 = vector.load %arg3[%c0_3, %c0_4] : memref<1x128xf32, #tpu.memory_space<vmem>>, vector<1x128xf32>
    %4 = vector.broadcast %3 : vector<1x128xf32> to vector<8x128xf32>
    %5 = arith.addf %2, %4 : vector<8x128xf32>
    %cst_5 = arith.constant 0.000000e+00 : f32
    %6 = vector.broadcast %cst_5 : f32 to vector<8x128xf32>
    %7 = arith.maximumf %5, %6 : vector<8x128xf32>
    %c0_6 = arith.constant 0 : index
    %c0_7 = arith.constant 0 : index
    %8 = vector.load %arg4[%c0_6, %c0_7] : memref<8x128xf32, #tpu.memory_space<vmem>>, vector<8x128xf32>
    tpu.vector_store %arg4[%c0_6, %c0_7], %7 {strides = array<i32>} : memref<8x128xf32, #tpu.memory_space<vmem>>, vector<8x128xf32>,
    return
  }
  func.func @transform_0(%arg0: i32) -> (i32, i32) {
    %c0_i32 = arith.constant 0 : i32
    %c0_i32_0 = arith.constant 0 : i32
    return %arg0, %c0_i32 : i32, i32
  }
  func.func @transform_1(%arg0: i32) -> (i32, i32) {
    %c0_i32 = arith.constant 0 : i32
    %c0_i32_0 = arith.constant 0 : i32
    %c0_i32_1 = arith.constant 0 : i32
    return %c0_i32, %c0_i32_0 : i32, i32
  }
  func.func @transform_2(%arg0: i32) -> (i32, i32) {
    %c0_i32 = arith.constant 0 : i32
    %c0_i32_0 = arith.constant 0 : i32
    %c0_i32_1 = arith.constant 0 : i32
    return %c0_i32, %c0_i32_0 : i32, i32
  }
  func.func @transform_3(%arg0: i32) -> (i32, i32) {
    %c0_i32 = arith.constant 0 : i32
    %c0_i32_0 = arith.constant 0 : i32
    return %arg0, %c0_i32 : i32, i32
  }
}

module attributes {stable_mosaic.version = 11 : i64} {
  func.func @_xw_kernel(%arg0: i32, %arg1: i32, %arg2: memref<8x128xbf16, #tpu.memory_space<vmem>>, %arg3: memref<128x128xbf16, #tpu.memory_space<vmem>>, %arg4: memref<8x128xbf16, #tpu.memory_space<vmem>>, %arg5: memref<8x128xf32, #tpu.memory_space<vmem>>) attributes {dimension_semantics = [#tpu.dimension_semantics<parallel>, #tpu.dimension_semantics<arbitrary>], iteration_bounds = array<i64: 2, 1>, scalar_prefetch = 0 : i64, scratch_operands = 1 : i64, tpu.core_type = #tpu.core_type<tc>, window_params = [{transform_indices = @transform_0, window_bounds = array<i64: 8, 128>}, {transform_indices = @transform_1, window_bounds = array<i64: 128, 128>}, {transform_indices = @transform_2, window_bounds = array<i64: 8, 128>}]} {
    %c0_i32 = arith.constant 0 : i32
    %0 = arith.cmpi eq, %arg1, %c0_i32 : i32
    %1 = arith.extui %0 : i1 to i32
    %c0_i32_0 = arith.constant 0 : i32
    %2 = arith.cmpi ne, %1, %c0_i32_0 : i32
    scf.if %2 {
      %cst_10 = arith.constant 0.000000e+00 : f32
      %12 = vector.broadcast %cst_10 : f32 to vector<8x128xf32>
      %c0_11 = arith.constant 0 : index
      %c0_12 = arith.constant 0 : index
      %13 = vector.load %arg5[%c0_11, %c0_12] : memref<8x128xf32, #tpu.memory_space<vmem>>, vector<8x128xf32>
      tpu.vector_store %arg5[%c0_11, %c0_12], %12 {strides = array<i32>} : memref<8x128xf32, #tpu.memory_space<vmem>>, vector<8x128xf32>,
    } else {
    }
    %c0 = arith.constant 0 : index
    %c0_1 = arith.constant 0 : index
    %3 = vector.load %arg5[%c0, %c0_1] : memref<8x128xf32, #tpu.memory_space<vmem>>, vector<8x128xf32>
    %c0_2 = arith.constant 0 : index
    %c0_3 = arith.constant 0 : index
    %4 = vector.load %arg2[%c0_2, %c0_3] : memref<8x128xbf16, #tpu.memory_space<vmem>>, vector<8x128xbf16>
    %c0_4 = arith.constant 0 : index
    %c0_5 = arith.constant 0 : index
    %5 = vector.load %arg3[%c0_4, %c0_5] : memref<128x128xbf16, #tpu.memory_space<vmem>>, vector<128x128xbf16>
    %cst = arith.constant dense<0.000000e+00> : vector<8x128xf32>
    %6 = tpu.matmul %4, %5, %cst {dimension_numbers = #tpu.dot_dimension_numbers<[1], [0], [0], [1], [0, 0, 1, 1], [], []>} : vector<8x128xbf16>, vector<128x128xbf16>, vector<8x128xf32> -> vector<8x128xf32>
    %7 = arith.addf %3, %6 : vector<8x128xf32>
    %c0_6 = arith.constant 0 : index
    %c0_7 = arith.constant 0 : index
    %8 = vector.load %arg5[%c0_6, %c0_7] : memref<8x128xf32, #tpu.memory_space<vmem>>, vector<8x128xf32>
    tpu.vector_store %arg5[%c0_6, %c0_7], %7 {strides = array<i32>} : memref<8x128xf32, #tpu.memory_space<vmem>>, vector<8x128xf32>,
    %c0_i32_8 = arith.constant 0 : i32
    %9 = arith.cmpi eq, %arg1, %c0_i32_8 : i32
    %10 = arith.extui %9 : i1 to i32
    %c0_i32_9 = arith.constant 0 : i32
    %11 = arith.cmpi ne, %10, %c0_i32_9 : i32
    scf.if %11 {
      %c0_10 = arith.constant 0 : index
      %c0_11 = arith.constant 0 : index
      %12 = vector.load %arg5[%c0_10, %c0_11] : memref<8x128xf32, #tpu.memory_space<vmem>>, vector<8x128xf32>
      %13 = arith.truncf %12 : vector<8x128xf32> to vector<8x128xbf16>
      %c0_12 = arith.constant 0 : index
      %c0_13 = arith.constant 0 : index
      %14 = vector.load %arg4[%c0_12, %c0_13] : memref<8x128xbf16, #tpu.memory_space<vmem>>, vector<8x128xbf16>
      tpu.vector_store %arg4[%c0_12, %c0_13], %13 {strides = array<i32>} : memref<8x128xbf16, #tpu.memory_space<vmem>>, vector<8x128xbf16>,
    } else {
    }
    return
  }
  func.func @transform_0(%arg0: i32, %arg1: i32) -> (i32, i32) {
    %c0_i32 = arith.constant 0 : i32
    return %arg0, %arg1 : i32, i32
  }
  func.func @transform_1(%arg0: i32, %arg1: i32) -> (i32, i32) {
    %c0_i32 = arith.constant 0 : i32
    %c0_i32_0 = arith.constant 0 : i32
    return %arg1, %c0_i32 : i32, i32
  }
  func.func @transform_2(%arg0: i32, %arg1: i32) -> (i32, i32) {
    %c0_i32 = arith.constant 0 : i32
    %c0_i32_0 = arith.constant 0 : i32
    return %arg0, %c0_i32 : i32, i32
  }
}

</mosaic_0001>

<llo_original>
// kernel: _gcn_forward.2
$region0: #{_gcn_forward.2}
  #allocation0 [shape = 'u32[]', space=smem, size = 0x4, offset = 0x4, fixed_abs, tag = 'smem constant byte address 0x4 - core index']
  #allocation1 [shape = 'u32[144,128]{1,0:T(1,128)}', space=vmem, size = 0x12000, scoped, tag = 'internal scratch']
  #allocation2 [shape = 'f32[8,128]{1,0:T(8,128)}', space=vmem, size = 0x1000, scoped, tag = 'scratch operand']
  %s0 = inlined_call_operand.vmem [shape: bf16[16,128], index: 0, kind: input, shape index: {}]
  %s1 = inlined_call_operand.vmem [shape: bf16[128,128], index: 1, kind: input, shape index: {}]
  %s2 = inlined_call_operand.vmem [shape: bf16[16,128], index: 2, kind: output, shape index: {}]
  %s3 = sld [smem:[#allocation0]]
  $region49: #{_gcn_forward.2} parent=0
    _
  %s5 = ssub.s32 1, %s3
  %s6 = scalar_select 0, %s5, %s3
  loop: start=0, step=1, limit=4
  $region2: #{_gcn_forward.2} parent=0 // loop_pre_header
    _
  $region3: #{_gcn_forward.2} parent=0 // loop_header
    %s8 = sphi 0, %s12
    %p9 = scmp.ge.s32.totalorder %s8, 4
    %s15 = sphi 0, %s27
    %s16 = sphi 0, %s23
    %s17 = sphi 0, %s15
    %s18 = sphi 0, %s16
    %s19 = sphi 0, %s17
    %s20 = sphi 0, %s18
    %s32 = sphi 0, %s34
    %s35 = sphi 0, %s32
    %s36 = sphi 0, %s35
    %s52 = sphi 0, %s36
    %s58 = sphi 0, %s60
    %s61 = sphi 0, %s58
    %s62 = sphi 0, %s61
    %s78 = sphi 0, %s62
    %s84 = sphi 0, %s86
    %s87 = sphi 0, %s84
    %s88 = sphi 0, %s87
    %s104 = sphi 0, %s88
  $region4: #{_gcn_forward.2} parent=0 // loop_header_branch
    %11 = sbr.rel (%p9) target = $region8
  $region5: #{_gcn_forward.2} parent=0 // loop_body
    %s13 = ssub.s32 %s8, 1
    %s14 = ssub.s32 %s8, 2
    %s21 = sadd.s32 1, %s16
    %p22 = scmp.ge.s32.totalorder %s21, 1
    %s23 = scalar_select %p22, 0, %s21
    %s24 = sadd.s32 1, %s15
    %s25 = scalar_select %p22, %s24, %s15
    %p26 = scmp.ge.s32.totalorder %s25, 2
    %s27 = scalar_select %p26, 0, %s25
    %s28 = ssub.s32 %s15, %s27
    %s29 = ssub.s32 %s16, %s23
    %s30 = sor.u32 %s28, %s29
    %p31 = scmp.eq.s32.totalorder %s30, 0
    %s33 = sadd.s32 %s32, 1
    %s34 = scalar_select %p31, %s32, %s33
    %p37 = pneg %p31
    %p38 = scmp.eq.s32.totalorder %s8, 1
    %p39 = por %p37, %p38
    %p40 = scmp.ne.s32.totalorder %s32, %s35
    %p41 = scmp.eq.s32.totalorder %s8, 0
    %p42 = por %p40, %p41
    %p43 = scmp.ne.s32.totalorder %s32, %s35
    %p44 = scmp.eq.s32.totalorder %s13, 1
    %p45 = por %p43, %p44
    %p46 = scmp.ne.s32.totalorder %s35, %s36
    %p47 = scmp.eq.s32.totalorder %s13, 0
    %p48 = por %p46, %p47
    %p49 = scmp.ne.s32.totalorder %s35, %s36
    %p50 = scmp.eq.s32.totalorder %s14, 1
    %p51 = por %p49, %p50
    %p53 = scmp.ne.s32.totalorder %s36, %s52
    %p54 = scmp.eq.s32.totalorder %s14, 0
    %p55 = por %p53, %p54
    %s56 = ssub.s32 %s16, %s23
    %p57 = scmp.eq.s32.totalorder %s56, 0
    %s59 = sadd.s32 %s58, 1
    %s60 = scalar_select %p57, %s58, %s59
    %p63 = pneg %p57
    %p64 = scmp.eq.s32.totalorder %s8, 1
    %p65 = por %p63, %p64
    %p66 = scmp.ne.s32.totalorder %s58, %s61
    %p67 = scmp.eq.s32.totalorder %s8, 0
    %p68 = por %p66, %p67
    %p69 = scmp.ne.s32.totalorder %s58, %s61
    %p70 = scmp.eq.s32.totalorder %s13, 1
    %p71 = por %p69, %p70
    %p72 = scmp.ne.s32.totalorder %s61, %s62
    %p73 = scmp.eq.s32.totalorder %s13, 0
    %p74 = por %p72, %p73
    %p75 = scmp.ne.s32.totalorder %s61, %s62
    %p76 = scmp.eq.s32.totalorder %s14, 1
    %p77 = por %p75, %p76
    %p79 = scmp.ne.s32.totalorder %s62, %s78
    %p80 = scmp.eq.s32.totalorder %s14, 0
    %p81 = por %p79, %p80
    %s82 = ssub.s32 %s15, %s27
    %p83 = scmp.eq.s32.totalorder %s82, 0
    %s85 = sadd.s32 %s84, 1
    %s86 = scalar_select %p83, %s84, %s85
    %p89 = pneg %p83
    %p90 = scmp.eq.s32.totalorder %s8, 1
    %p91 = por %p89, %p90
    %p92 = scmp.ne.s32.totalorder %s84, %s87
    %p93 = scmp.eq.s32.totalorder %s8, 0
    %p94 = por %p92, %p93
    %p95 = scmp.ne.s32.totalorder %s84, %s87
    %p96 = scmp.eq.s32.totalorder %s13, 1
    %p97 = por %p95, %p96
    %p98 = scmp.ne.s32.totalorder %s87, %s88
    %p99 = scmp.eq.s32.totalorder %s13, 0
    %p100 = por %p98, %p99
    %p101 = scmp.ne.s32.totalorder %s87, %s88
    %p102 = scmp.eq.s32.totalorder %s14, 1
    %p103 = por %p101, %p102
    %p105 = scmp.ne.s32.totalorder %s88, %s104
    %p106 = scmp.eq.s32.totalorder %s14, 0
    %p107 = por %p105, %p106
    %p108 = scmp.le.s32.totalorder 1, %s8
    %p109 = scmp.lt.s32.totalorder %s8, 3
    %p110 = pnand %p108, %p109
    %p111 = pneg %p110
    // Predicated region
    $region9: #{_gcn_forward.2} parent=5 // pred_check
      _
    $region10: #{_gcn_forward.2} parent=5 // pred_check_branch
      %113 = sbr.rel (%p110) target = $region12
    $region11: #{_gcn_forward.2} parent=5 // pred_region
      %s114 = ssub.s32 %s8, 1
      // Predicated region
      $region13: #{_gcn_forward.2} parent=11 // pred_check
        %p115 = pneg %p74
      $region14: #{_gcn_forward.2} parent=11 // pred_check_branch
        %117 = sbr.rel (%p115) target = $region16
      $region15: #{_gcn_forward.2} parent=11 // pred_region
        %s118 = smul.u32 16, %s18
        %p119 = scmp.lt.s32.totalorder %s118, 15
        %s120 = scalar_select %p119, %s118, 15
        %s121 = smul.addr %s120, 4
        %s122 = scalar_lea.vmem %s1, %s121
        %s123 = smul.u32 16, %s18
      $region16: #{_gcn_forward.2} parent=11 // pred_fallthru
        _
    $region12: #{_gcn_forward.2} parent=5 // pred_fallthru
      _
    %p124 = scmp.lt.s32.totalorder %s8, 2
    // Predicated region
    $region17: #{_gcn_forward.2} parent=5 // pred_check
      %p125 = pneg %p124
    $region18: #{_gcn_forward.2} parent=5 // pred_check_branch
      %127 = sbr.rel (%p125) target = $region20
    $region19: #{_gcn_forward.2} parent=5 // pred_region
      // Predicated region
      $region21: #{_gcn_forward.2} parent=19 // pred_check
        %p128 = pneg %p42
      $region22: #{_gcn_forward.2} parent=19 // pred_check_branch
        %130 = sbr.rel (%p128) target = $region24
      $region23: #{_gcn_forward.2} parent=19 // pred_region
        %p131 = scmp.lt.s32.totalorder %s15, 1
        %s132 = scalar_select %p131, %s15, 1
        %p133 = scmp.lt.s32.totalorder %s16, 0
        %s134 = scalar_select %p133, %s16, 0
        %s135 = sadd.s32 %s134, %s132
        %s136 = smul.addr %s135, 4
        %s137 = scalar_lea.vmem %s0, %s136
      $region24: #{_gcn_forward.2} parent=19 // pred_fallthru
        _
    $region20: #{_gcn_forward.2} parent=5 // pred_fallthru
      _
    %p138 = scmp.le.s32.totalorder 1, %s8
    %p139 = scmp.lt.s32.totalorder %s8, 3
    %p140 = pnand %p138, %p139
    %p141 = pneg %p140
    // Predicated region
    $region25: #{_gcn_forward.2} parent=5 // pred_check
      _
    $region26: #{_gcn_forward.2} parent=5 // pred_check_branch
      %143 = sbr.rel (%p140) target = $region28
    $region27: #{_gcn_forward.2} parent=5 // pred_region
      %s144 = ssub.s32 %s8, 1
      %p145 = scmp.lt.s32.totalorder %s17, 1
      %s146 = scalar_select %p145, %s17, 1
      %p147 = scmp.lt.s32.totalorder %s18, 0
      %s148 = scalar_select %p147, %s18, 0
      %s149 = sadd.s32 %s148, %s146
      %s150 = smul.addr %s149, 4
      %s151 = scalar_lea.vmem %s0, %s150
      %p152 = pneg %p48
      %p153 = pneg %p45
      %s154 = smul.u32 16, %s18
      %p155 = scmp.lt.s32.totalorder %s154, 15
      %s156 = scalar_select %p155, %s154, 15
      %s157 = smul.addr %s156, 4
      %s158 = scalar_lea.vmem %s1, %s157
      %p159 = pneg %p74
      %p160 = pneg %p71
      %p161 = pneg %p100
      %p162 = pneg %p97
      %p163 = scmp.lt.s32.totalorder %s17, 1
      %s164 = scalar_select %p163, %s17, 1
      %s165 = smul.addr %s164, 4
      %s166 = scalar_lea.vmem %s2, %s165
      %p167 = scmp.lt.s32.totalorder %s17, 1
      %s168 = scalar_select %p167, %s17, 1
      %p169 = scmp.lt.s32.totalorder %s18, 0
      %s170 = scalar_select %p169, %s18, 0
      %s171 = sadd.s32 %s170, %s168
      %s172 = smul.addr %s171, 4
      %s173 = scalar_lea.vmem %s0, %s172
      %s174 = smul.u32 16, %s18
      %p175 = scmp.lt.s32.totalorder %s174, 15
      %s176 = scalar_select %p175, %s174, 15
      %s177 = smul.addr %s176, 4
      %s178 = scalar_lea.vmem %s1, %s177
      %s179 = smul.u32 16, %s18
      %p180 = scmp.lt.s32.totalorder %s17, 1
      %s181 = scalar_select %p180, %s17, 1
      %s182 = smul.addr %s181, 4
      %s183 = scalar_lea.vmem %s2, %s182
      %p185 = scmp.eq.s32.totalorder %s18, 0
      // Predicated region
      $region29: #{_gcn_forward.2} parent=27 // pred_check
        %p186 = pneg %p185
      $region30: #{_gcn_forward.2} parent=27 // pred_check_branch
        %188 = sbr.rel (%p186) target = $region32
      $region31: #{_gcn_forward.2} parent=27 // pred_region
        %189 = vst [vmem:[#allocation2] sm:$0xff] 0.0
      $region32: #{_gcn_forward.2} parent=27 // pred_fallthru
        _
      %v190 = vld [vmem:[#allocation2] sm:$0xff]
      %v191 = vld [vmem:[%s173] sm:$0xf]
      %v192 = vld [vmem:[%s178] sm:$0xf]
      %v193 = vld [vmem:[%s178 + $0x4] sm:$0xf]
      %v194 = vld [vmem:[%s178 + $0x8] sm:$0xf]
      %v195 = vld [vmem:[%s178 + $0xc] sm:$0xf]
      %v196 = vld [vmem:[%s178 + $0x10] sm:$0xf]
      %v197 = vld [vmem:[%s178 + $0x14] sm:$0xf]
      %v198 = vld [vmem:[%s178 + $0x18] sm:$0xf]
      %v199 = vld [vmem:[%s178 + $0x1c] sm:$0xf]
      %v200 = vld [vmem:[%s178 + $0x20] sm:$0xf]
      %v201 = vld [vmem:[%s178 + $0x24] sm:$0xf]
      %v202 = vld [vmem:[%s178 + $0x28] sm:$0xf]
      %v203 = vld [vmem:[%s178 + $0x2c] sm:$0xf]
      %v204 = vld [vmem:[%s178 + $0x30] sm:$0xf]
      %v205 = vld [vmem:[%s178 + $0x34] sm:$0xf]
      %v206 = vld [vmem:[%s178 + $0x38] sm:$0xf]
      %v207 = vld [vmem:[%s178 + $0x3c] sm:$0xf]
      %v224 = vunpack.c.l.b16 %v192
      %v225 = vunpack.c.l.b16 %v193
      %v226 = vunpack.c.l.b16 %v194
      %v227 = vunpack.c.l.b16 %v195
      %v228 = vunpack.c.l.b16 %v196
      %v229 = vunpack.c.l.b16 %v197
      %v230 = vunpack.c.l.b16 %v198
      %v231 = vunpack.c.l.b16 %v199
      %v232 = vunpack.c.l.b16 %v200
      %v233 = vunpack.c.l.b16 %v201
      %v234 = vunpack.c.l.b16 %v202
      %v235 = vunpack.c.l.b16 %v203
      %v236 = vunpack.c.l.b16 %v204
      %v237 = vunpack.c.l.b16 %v205
      %v238 = vunpack.c.l.b16 %v206
      %v239 = vunpack.c.l.b16 %v207
      %v240 = vpack.c.b16 %v225, %v224
      %v241 = vpack.c.b16 %v227, %v226
      %v242 = vpack.c.b16 %v229, %v228
      %v243 = vpack.c.b16 %v231, %v230
      %v244 = vpack.c.b16 %v233, %v232
      %v245 = vpack.c.b16 %v235, %v234
      %v246 = vpack.c.b16 %v237, %v236
      %v247 = vpack.c.b16 %v239, %v238
      %256 = vmatprep.subr.bf16.mxu0 0
      %257 = vmatpush1.bf16.msra.mxu0 %v240
      %258 = vmatprep.subr.bf16.mxu0 0
      %259 = vmatpush1.bf16.msra.mxu0 %v241
      %260 = vmatprep.subr.bf16.mxu0 0
      %261 = vmatpush1.bf16.msra.mxu0 %v242
      %262 = vmatprep.subr.bf16.mxu0 0
      %263 = vmatpush1.bf16.msra.mxu0 %v243
      %264 = vmatprep.subr.bf16.mxu0 0
      %265 = vmatpush1.bf16.msra.mxu0 %v244
      %266 = vmatprep.subr.bf16.mxu0 0
      %267 = vmatpush1.bf16.msra.mxu0 %v245
      %268 = vmatprep.subr.bf16.mxu0 0
      %269 = vmatpush1.bf16.msra.mxu0 %v246
      %270 = vmatprep.subr.bf16.mxu0 0
      %271 = vmatpush1.bf16.msra.mxu0 %v247
      %272 = vmatprep.subr.bf16.mxu0 0
      %273 = vmatpush1.bf16.msra.mxu0 0
      %274 = vmatprep.subr.bf16.mxu0 0
      %275 = vmatpush1.bf16.msra.mxu0 0
      %276 = vmatprep.subr.bf16.mxu0 0
      %277 = vmatpush1.bf16.msra.mxu0 0
      %278 = vmatprep.subr.bf16.mxu0 0
      %279 = vmatpush1.bf16.msra.mxu0 0
      %280 = vmatprep.subr.bf16.mxu0 0
      %281 = vmatpush1.bf16.msra.mxu0 0
      %282 = vmatprep.subr.bf16.mxu0 0
      %283 = vmatpush1.bf16.msra.mxu0 0
      %284 = vmatprep.subr.bf16.mxu0 0
      %285 = vmatpush1.bf16.msra.mxu0 0
      %286 = vmatprep.subr.bf16.mxu0 0
      %287 = vmatpush1.bf16.msra.mxu0 0
      %288 = vmatprep.mubr.bf16.mxu0 0
      %289 = vmatmul.mubr.bf16.gmra.mrb[0].mxu0 %v191
      %v290 = vpop.f32.mrb[0].mxu0
      %v291 = vadd.f32 0.0, %v290
      %v292 = vpop.f32.mrb[0].mxu0
      %v293 = vpop.f32.mrb[0].mxu0
      %v294 = vpop.f32.mrb[0].mxu0
      %295 = vdwg.mxu0
      %v296 = vadd.f32 %v190, %v291
      %297 = vst [vmem:[#allocation2] sm:$0xff] %v296
      // Predicated region
      $region33: #{_gcn_forward.2} parent=27 // pred_check
        %p298 = pneg %p185
      $region34: #{_gcn_forward.2} parent=27 // pred_check_branch
        %300 = sbr.rel (%p298) target = $region36
      $region35: #{_gcn_forward.2} parent=27 // pred_region
        %v301 = vld [vmem:[#allocation2] sm:$0xff]
        %v302 = vpack.c.bf16 %v301, %v301
        %303 = vst [vmem:[%s183] sm:$0xf] %v302
      $region36: #{_gcn_forward.2} parent=27 // pred_fallthru
        _
      %p304 = scmp.lt.s32.totalorder %s17, 1
      %s305 = scalar_select %p304, %s17, 1
      %s306 = smul.addr %s305, 4
      %s307 = scalar_lea.vmem %s2, %s306
      // Predicated region
      $region37: #{_gcn_forward.2} parent=27 // pred_check
        %p308 = pneg %p97
      $region38: #{_gcn_forward.2} parent=27 // pred_check_branch
        %310 = sbr.rel (%p308) target = $region40
      $region39: #{_gcn_forward.2} parent=27 // pred_region
        _
      $region40: #{_gcn_forward.2} parent=27 // pred_fallthru
        _
    $region28: #{_gcn_forward.2} parent=5 // pred_fallthru
      _
    %p311 = scmp.le.s32.totalorder 2, %s8
    // Predicated region
    $region41: #{_gcn_forward.2} parent=5 // pred_check
      %p312 = pneg %p311
    $region42: #{_gcn_forward.2} parent=5 // pred_check_branch
      %314 = sbr.rel (%p312) target = $region44
    $region43: #{_gcn_forward.2} parent=5 // pred_region
      %s315 = ssub.s32 %s8, 2
      // Predicated region
      $region45: #{_gcn_forward.2} parent=43 // pred_check
        %p316 = pneg %p103
      $region46: #{_gcn_forward.2} parent=43 // pred_check_branch
        %318 = sbr.rel (%p316) target = $region48
      $region47: #{_gcn_forward.2} parent=43 // pred_region
        %p319 = scmp.lt.s32.totalorder %s19, 1
        %s320 = scalar_select %p319, %s19, 1
        %s321 = smul.addr %s320, 4
        %s322 = scalar_lea.vmem %s2, %s321
      $region48: #{_gcn_forward.2} parent=43 // pred_fallthru
        _
    $region44: #{_gcn_forward.2} parent=5 // pred_fallthru
      _
  $region6: #{_gcn_forward.2} parent=0 // loop_footer
    %s12 = sadd.s32 1, %s8
  $region7: #{_gcn_forward.2} parent=0 // loop_footer_branch
    %7 = sbr.rel target = $region3
  $region8: #{_gcn_forward.2} parent=0 // loop_exit
    _

// kernel: _gcn_forward.3
$region0: #{_gcn_forward.3}
  #allocation0 [shape = 'u32[]', space=smem, size = 0x4, offset = 0x4, fixed_abs, tag = 'smem constant byte address 0x4 - core index']
  #allocation1 [shape = 'u32[144,128]{1,0:T(1,128)}', space=vmem, size = 0x12000, scoped, tag = 'internal scratch']
  %s0 = inlined_call_operand.vmem [shape: bf16[16,16], index: 0, kind: input, shape index: {}]
  %s1 = inlined_call_operand.vmem [shape: bf16[16,128], index: 1, kind: input, shape index: {}]
  %s2 = inlined_call_operand.vmem [shape: f32[1,128], index: 2, kind: input, shape index: {}]
  %s3 = inlined_call_operand.hbm [shape: f32[16,128], index: 3, kind: output, shape index: {}]
  %s4 = sld [smem:[#allocation0]]
  $region45: #{_gcn_forward.3} parent=0
    _
  %s6 = ssub.s32 1, %s4
  %s7 = scalar_select 0, %s6, %s4
  $region1: #{_gcn_forward.3} parent=0
    #allocation2 [shape = 'u8[8192]{0}', space=vmem, size = 0x2000, scoped, tag = 'output window, operand 0']
    #allocation3 [shape = 's32[2]{0}', space=sflag, size = 0x8, scoped, tag = 'scoped memory for _gcn_forward.3']
    %8 = vsyncpa [#allocation3], 0
    %s9 = scalar_lea.sflag [#allocation3], 1
    %10 = vsyncpa %s9, 0
    loop: start=0, step=1, limit=4
    $region2: #{_gcn_forward.3} parent=1 // loop_pre_header
      _
    $region3: #{_gcn_forward.3} parent=1 // loop_header
      %s12 = sphi 0, %s16
      %p13 = scmp.ge.s32.totalorder %s12, 4
      %s22 = sphi 0, %s24
      %s25 = sphi 0, %s22
      %s26 = sphi 0, %s25
      %s42 = sphi 0, %s26
      %s46 = sphi 0, %s46
      %s48 = sphi 0, %s46
      %s49 = sphi 0, %s48
      %s63 = sphi 0, %s49
      %s67 = sphi 0, %s67
      %s69 = sphi 0, %s67
      %s70 = sphi 0, %s69
      %s84 = sphi 0, %s70
      %s90 = sphi 0, %s92
      %s93 = sphi 0, %s90
      %s94 = sphi 0, %s93
      %s110 = sphi 0, %s94
    $region4: #{_gcn_forward.3} parent=1 // loop_header_branch
      %15 = sbr.rel (%p13) target = $region8
    $region5: #{_gcn_forward.3} parent=1 // loop_body
      %s17 = ssub.s32 %s12, 1
      %s18 = ssub.s32 %s12, 2
      %s19 = sadd.s32 %s12, 1
      %s20 = ssub.s32 %s12, %s19
      %p21 = scmp.eq.s32.totalorder %s20, 0
      %s23 = sadd.s32 %s22, 1
      %s24 = scalar_select %p21, %s22, %s23
      %p27 = pneg %p21
      %p28 = scmp.eq.s32.totalorder %s12, 1
      %p29 = por %p27, %p28
      %p30 = scmp.ne.s32.totalorder %s22, %s25
      %p31 = scmp.eq.s32.totalorder %s12, 0
      %p32 = por %p30, %p31
      %p33 = scmp.ne.s32.totalorder %s22, %s25
      %p34 = scmp.eq.s32.totalorder %s17, 1
      %p35 = por %p33, %p34
      %p36 = scmp.ne.s32.totalorder %s25, %s26
      %p37 = scmp.eq.s32.totalorder %s17, 0
      %p38 = por %p36, %p37
      %p39 = scmp.ne.s32.totalorder %s25, %s26
      %p40 = scmp.eq.s32.totalorder %s18, 1
      %p41 = por %p39, %p40
      %p43 = scmp.ne.s32.totalorder %s26, %s42
      %p44 = scmp.eq.s32.totalorder %s18, 0
      %p45 = por %p43, %p44
      %s47 = sadd.s32 %s46, 1
      %p50 = scmp.eq.s32.totalorder %s12, 1
      %p51 = scmp.ne.s32.totalorder %s46, %s48
      %p52 = scmp.eq.s32.totalorder %s12, 0
      %p53 = por %p51, %p52
      %p54 = scmp.ne.s32.totalorder %s46, %s48
      %p55 = scmp.eq.s32.totalorder %s17, 1
      %p56 = por %p54, %p55
      %p57 = scmp.ne.s32.totalorder %s48, %s49
      %p58 = scmp.eq.s32.totalorder %s17, 0
      %p59 = por %p57, %p58
      %p60 = scmp.ne.s32.totalorder %s48, %s49
      %p61 = scmp.eq.s32.totalorder %s18, 1
      %p62 = por %p60, %p61
      %p64 = scmp.ne.s32.totalorder %s49, %s63
      %p65 = scmp.eq.s32.totalorder %s18, 0
      %p66 = por %p64, %p65
      %s68 = sadd.s32 %s67, 1
      %p71 = scmp.eq.s32.totalorder %s12, 1
      %p72 = scmp.ne.s32.totalorder %s67, %s69
      %p73 = scmp.eq.s32.totalorder %s12, 0
      %p74 = por %p72, %p73
      %p75 = scmp.ne.s32.totalorder %s67, %s69
      %p76 = scmp.eq.s32.totalorder %s17, 1
      %p77 = por %p75, %p76
      %p78 = scmp.ne.s32.totalorder %s69, %s70
      %p79 = scmp.eq.s32.totalorder %s17, 0
      %p80 = por %p78, %p79
      %p81 = scmp.ne.s32.totalorder %s69, %s70
      %p82 = scmp.eq.s32.totalorder %s18, 1
      %p83 = por %p81, %p82
      %p85 = scmp.ne.s32.totalorder %s70, %s84
      %p86 = scmp.eq.s32.totalorder %s18, 0
      %p87 = por %p85, %p86
      %s88 = ssub.s32 %s12, %s19
      %p89 = scmp.eq.s32.totalorder %s88, 0
      %s91 = sadd.s32 %s90, 1
      %s92 = scalar_select %p89, %s90, %s91
      %p95 = pneg %p89
      %p96 = scmp.eq.s32.totalorder %s12, 1
      %p97 = por %p95, %p96
      %p98 = scmp.ne.s32.totalorder %s90, %s93
      %p99 = scmp.eq.s32.totalorder %s12, 0
      %p100 = por %p98, %p99
      %p101 = scmp.ne.s32.totalorder %s90, %s93
      %p102 = scmp.eq.s32.totalorder %s17, 1
      %p103 = por %p101, %p102
      %p104 = scmp.ne.s32.totalorder %s93, %s94
      %p105 = scmp.eq.s32.totalorder %s17, 0
      %p106 = por %p104, %p105
      %p107 = scmp.ne.s32.totalorder %s93, %s94
      %p108 = scmp.eq.s32.totalorder %s18, 1
      %p109 = por %p107, %p108
      %p111 = scmp.ne.s32.totalorder %s94, %s110
      %p112 = scmp.eq.s32.totalorder %s18, 0
      %p113 = por %p111, %p112
      %p114 = scmp.le.s32.totalorder 1, %s12
      %p115 = scmp.lt.s32.totalorder %s12, 3
      %p116 = pnand %p114, %p115
      %p117 = pneg %p116
      // Predicated region
      $region9: #{_gcn_forward.3} parent=5 // pred_check
        _
      $region10: #{_gcn_forward.3} parent=5 // pred_check_branch
        %119 = sbr.rel (%p116) target = $region12
      $region11: #{_gcn_forward.3} parent=5 // pred_region
        %s120 = ssub.s32 %s12, 1
        // Predicated region
        $region13: #{_gcn_forward.3} parent=11 // pred_check
          %p121 = pneg %p59
        $region14: #{_gcn_forward.3} parent=11 // pred_check_branch
          %123 = sbr.rel (%p121) target = $region16
        $region15: #{_gcn_forward.3} parent=11 // pred_region
          _
        $region16: #{_gcn_forward.3} parent=11 // pred_fallthru
          _
        // Predicated region
        $region17: #{_gcn_forward.3} parent=11 // pred_check
          %p124 = pneg %p80
        $region18: #{_gcn_forward.3} parent=11 // pred_check_branch
          %126 = sbr.rel (%p124) target = $region20
        $region19: #{_gcn_forward.3} parent=11 // pred_region
          _
        $region20: #{_gcn_forward.3} parent=11 // pred_fallthru
          _
      $region12: #{_gcn_forward.3} parent=5 // pred_fallthru
        _
      %p127 = scmp.lt.s32.totalorder %s12, 2
      // Predicated region
      $region21: #{_gcn_forward.3} parent=5 // pred_check
        %p128 = pneg %p127
      $region22: #{_gcn_forward.3} parent=5 // pred_check_branch
        %130 = sbr.rel (%p128) target = $region24
      $region23: #{_gcn_forward.3} parent=5 // pred_region
        // Predicated region
        $region25: #{_gcn_forward.3} parent=23 // pred_check
          %p131 = pneg %p32
        $region26: #{_gcn_forward.3} parent=23 // pred_check_branch
          %133 = sbr.rel (%p131) target = $region28
        $region27: #{_gcn_forward.3} parent=23 // pred_region
          %p134 = scmp.lt.s32.totalorder %s12, 1
          %s135 = scalar_select %p134, %s12, 1
          %s136 = smul.addr %s135, 4
          %s137 = scalar_lea.vmem %s0, %s136
        $region28: #{_gcn_forward.3} parent=23 // pred_fallthru
          _
      $region24: #{_gcn_forward.3} parent=5 // pred_fallthru
        _
      %p138 = scmp.le.s32.totalorder 1, %s12
      %p139 = scmp.lt.s32.totalorder %s12, 3
      %p140 = pnand %p138, %p139
      %p141 = pneg %p140
      // Predicated region
      $region29: #{_gcn_forward.3} parent=5 // pred_check
        _
      $region30: #{_gcn_forward.3} parent=5 // pred_check_branch
        %143 = sbr.rel (%p140) target = $region32
      $region31: #{_gcn_forward.3} parent=5 // pred_region
        %s144 = ssub.s32 %s12, 1
        %p145 = scmp.lt.s32.totalorder %s17, 1
        %s146 = scalar_select %p145, %s17, 1
        %s147 = smul.addr %s146, 4
        %s148 = scalar_lea.vmem %s0, %s147
        %p149 = pneg %p38
        %p150 = pneg %p35
        %p151 = pneg %p59
        %p152 = pneg %p56
        %p153 = pneg %p80
        %p154 = pneg %p77
        %p155 = pneg %p106
        %p156 = pneg %p103
        %s157 = sand.u32 %s93, 1
        %s158 = scalar_lea.sflag [#allocation3], %s157
        %s159 = sand.u32 %s93, 1
        %s160 = smul.addr %s159, 8
        %s161 = scalar_lea.vmem [#allocation2], %s160
        %p162 = scmp.lt.s32.totalorder %s17, 1
        %s163 = scalar_select %p162, %s17, 1
        %s164 = smul.addr %s163, 4
        %s165 = scalar_lea.vmem %s0, %s164
        %v167 = vld [vmem:[%s165] sm:$0xf]
        %v168 = vld [vmem:[%s1] sm:$0xf]
        %v169 = vld [vmem:[%s1 + $0x4] sm:$0xf]
        %v170 = vld [vmem:[%s2] sm:$0x1]
        %v172 = vlaneseq
        %v173 = vshrl.u32 %v172, 7
        %v174 = vsub.s32 0, %v173
        %v175 = vrot.slane %v170, %v174
        %v179 = vunpack.c.l.b16 %v168
        %v180 = vunpack.c.l.b16 %v169
        %v181 = vpack.c.b16 %v180, %v179
        %vm183 = vcmask 130048
        %v185 = vsel %vm183, %v167, 0
        %187 = vmatprep.subr.bf16.mxu0 0
        %188 = vmatpush1.bf16.msra.mxu0 %v181
        %189 = vmatprep.subr.bf16.mxu0 0
        %190 = vmatpush1.bf16.msra.mxu0 0
        %191 = vmatprep.subr.bf16.mxu0 0
        %192 = vmatpush1.bf16.msra.mxu0 0
        %193 = vmatprep.subr.bf16.mxu0 0
        %194 = vmatpush1.bf16.msra.mxu0 0
        %195 = vmatprep.subr.bf16.mxu0 0
        %196 = vmatpush1.bf16.msra.mxu0 0
        %197 = vmatprep.subr.bf16.mxu0 0
        %198 = vmatpush1.bf16.msra.mxu0 0
        %199 = vmatprep.subr.bf16.mxu0 0
        %200 = vmatpush1.bf16.msra.mxu0 0
        %201 = vmatprep.subr.bf16.mxu0 0
        %202 = vmatpush1.bf16.msra.mxu0 0
        %203 = vmatprep.subr.bf16.mxu0 0
        %204 = vmatpush1.bf16.msra.mxu0 0
        %205 = vmatprep.subr.bf16.mxu0 0
        %206 = vmatpush1.bf16.msra.mxu0 0
        %207 = vmatprep.subr.bf16.mxu0 0
        %208 = vmatpush1.bf16.msra.mxu0 0
        %209 = vmatprep.subr.bf16.mxu0 0
        %210 = vmatpush1.bf16.msra.mxu0 0
        %211 = vmatprep.subr.bf16.mxu0 0
        %212 = vmatpush1.bf16.msra.mxu0 0
        %213 = vmatprep.subr.bf16.mxu0 0
        %214 = vmatpush1.bf16.msra.mxu0 0
        %215 = vmatprep.subr.bf16.mxu0 0
        %216 = vmatpush1.bf16.msra.mxu0 0
        %217 = vmatprep.subr.bf16.mxu0 0
        %218 = vmatpush1.bf16.msra.mxu0 0
        %219 = vmatprep.mubr.bf16.mxu0 0
        %220 = vmatmul.mubr.bf16.gmra.mrb[0].mxu0 %v185
        %v221 = vpop.f32.mrb[0].mxu0
        %v222 = vadd.f32 %v175, %v221
        %v223 = vpop.f32.mrb[0].mxu0
        %v224 = vpop.f32.mrb[0].mxu0
        %v225 = vpop.f32.mrb[0].mxu0
        %226 = vdwg.mxu0
        %v227 = vmax.f32 %v222, 0.0
        %228 = vst [vmem:[%s161] sm:$0xff] %v227
        %s229 = sand.u32 %s93, 1
        %s230 = scalar_lea.sflag [#allocation3], %s229
        %s231 = sand.u32 %s93, 1
        %s232 = smul.addr %s231, 8
        %s233 = scalar_lea.vmem [#allocation2], %s232
        // Predicated region
        $region33: #{_gcn_forward.3} parent=31 // pred_check
          %p234 = pneg %p103
        $region34: #{_gcn_forward.3} parent=31 // pred_check_branch
          %236 = sbr.rel (%p234) target = $region36
        $region35: #{_gcn_forward.3} parent=31 // pred_region
          %s238 = ssub.s32 128, 128
          %239 = vsyncadd %s230, %s238
          %s240 = smul.addr %s17, 128
          %s241 = scalar_lea.hbm %s3, %s240
          %s243 = sshll.u32 %s233, 4
          %s244 = int_to_ptr.vmem [resolvable:$true] %s243
          %246 = dma.vmem_to_hbm [thread:$0]  %s244, 128, %s241, %s230
        $region36: #{_gcn_forward.3} parent=31 // pred_fallthru
          _
      $region32: #{_gcn_forward.3} parent=5 // pred_fallthru
        _
      %p247 = scmp.le.s32.totalorder 2, %s12
      // Predicated region
      $region37: #{_gcn_forward.3} parent=5 // pred_check
        %p248 = pneg %p247
      $region38: #{_gcn_forward.3} parent=5 // pred_check_branch
        %250 = sbr.rel (%p248) target = $region40
      $region39: #{_gcn_forward.3} parent=5 // pred_region
        %s251 = ssub.s32 %s12, 2
        // Predicated region
        $region41: #{_gcn_forward.3} parent=39 // pred_check
          %p252 = pneg %p109
        $region42: #{_gcn_forward.3} parent=39 // pred_check_branch
          %254 = sbr.rel (%p252) target = $region44
        $region43: #{_gcn_forward.3} parent=39 // pred_region
          %s255 = sand.u32 %s94, 1
          %s256 = scalar_lea.sflag [#allocation3], %s255
          %s257 = sand.u32 %s94, 1
          %s258 = smul.addr %s257, 8
          %s259 = scalar_lea.vmem [#allocation2], %s258
          %260 = dma.done %s256, 128
        $region44: #{_gcn_forward.3} parent=39 // pred_fallthru
          _
      $region40: #{_gcn_forward.3} parent=5 // pred_fallthru
        _
    $region6: #{_gcn_forward.3} parent=1 // loop_footer
      %s16 = sadd.s32 1, %s12
    $region7: #{_gcn_forward.3} parent=1 // loop_footer_branch
      %11 = sbr.rel target = $region3
    $region8: #{_gcn_forward.3} parent=1 // loop_exit
      _
    %261 = vsyncpa [#allocation3], 1
    %s262 = scalar_lea.sflag [#allocation3], 1
    %263 = vsyncpa %s262, 1

</llo_original>
